<compile_context>
chip_gen: v5e
topology: v5e:2x2
jax: 0.10.0
libtpu: 0.0.40
codegen_flags: <defaults>
</compile_context>

<pallas_src>
import functools
import math

import jax
import jax.numpy as jnp
from jax.experimental import pallas as pl
from jax.experimental.pallas import tpu as pltpu


def _cdiv(a: int, b: int) -> int:
    return -(-a // b)


def _round_up(a: int, b: int) -> int:
    return _cdiv(a, b) * b


def _rms_norm_kernel(x_ref, w_ref, o_ref, *, eps: float, d_true: int):
    # x_ref: (TB, Dp), w_ref: (1, Dp), o_ref: (TB, Dp).  Dp on lanes, TB on sublanes.
    # Pass 1: sum of squares in f32 (on-the-fly upcast, nothing forced to stay live).
    xf = x_ref[...].astype(jnp.float32)
    ssq = jnp.sum(xf * xf, axis=-1, keepdims=True)            # (TB, 1)
    ms = ssq * (1.0 / d_true)                                  # mean over the TRUE D
    # eps is added AFTER the sqrt (torch semantics) -- do NOT fold into an rsqrt.
    # For a partial last row-tile, garbage rows may produce inf/NaN here, but
    # their stores are masked off by Pallas, so this is benign.
    inv = pl.reciprocal(jnp.sqrt(ms) + eps, approx=True)       # EUP slot, frees VALU
    # Pass 2: re-read the VMEM tile (vector loads are cheap; HBM is the binder).
    w = w_ref[...].astype(jnp.float32)                         # (1, Dp) broadcast
    o_ref[...] = ((x_ref[...].astype(jnp.float32) * inv) * w).astype(o_ref.dtype)


def rms_norm(x: jax.Array, weight: jax.Array, eps: float = 1e-5) -> jax.Array:
    """Equivalent of RMSNorm(d, eps).forward(x) with the given weight."""
    orig_shape = x.shape
    d = orig_shape[-1]
    n = math.prod(orig_shape[:-1]) if len(orig_shape) > 1 else 1
    out_dtype = jnp.promote_types(x.dtype, weight.dtype)       # torch promotion

    x_it = jnp.dtype(x.dtype).itemsize
    out_it = jnp.dtype(out_dtype).itemsize
    w_it = jnp.dtype(weight.dtype).itemsize

    # --- Lane padding so output stores are unmasked (lane-dense). -------------
    d_pad = max(128, _round_up(d, 128))
    x2 = x.reshape(n, d)
    w2 = weight.reshape(1, d)
    if d_pad != d:
        x2 = jnp.pad(x2, ((0, 0), (0, d_pad - d)))
        w2 = jnp.pad(w2, ((0, 0), (0, d_pad - d)))

    # --- VMEM-aware adaptive row tiling. --------------------------------------
    try:
        vmem_cap = int(getattr(pltpu.get_tpu_info(), "vmem_capacity_bytes", 64 << 20))
    except Exception:  # pragma: no cover - conservative fallback (fits v5e..v7x)
        vmem_cap = 64 << 20
    # Budget ~half of physical VMEM (32 MiB on v7x, 48 MiB on v5e/v6e).
    budget = max(8 << 20, min(vmem_cap // 2, 48 << 20))
    # Per-row bytes: double-buffered input + output tiles plus ~2x f32 temps.
    bytes_per_row = d_pad * (2 * (x_it + out_it) + 8)
    tb_vmem = max(1, budget // bytes_per_row)

    sublane = max(8, 32 // x_it)         # row packing: 8 f32 / 16 bf16 / 32 int8
    cap_rows = 1024                      # biggest tile that still pays off (v6e sweep)
    if n <= 2 * sublane:
        # Too few rows to split into two aligned tiles: one full-extent tile.
        tb = n
    else:
        # Smallest sublane-multiple >= ceil(n/2): guarantees >= 2 grid steps so
        # both v7x TensorCores get work.
        half = sublane * _cdiv(_cdiv(n, 2), sublane)
        tb = min(cap_rows, tb_vmem, half)
        tb = max(sublane, (tb // sublane) * sublane)
        tb = min(tb, n)
    grid = (_cdiv(n, tb),)

    # Scoped-VMEM limit sized to the actual footprint (+50% headroom), never
    # below 32 MiB and never above ~7/8 of physical VMEM.
    step_bytes = 2 * tb * d_pad * (x_it + out_it) + 2 * tb * d_pad * 4 + 2 * d_pad * w_it
    vmem_limit = int(min(vmem_cap - vmem_cap // 8, max(32 << 20, (step_bytes * 3) // 2)))

    cost = pl.CostEstimate(
        flops=4 * n * d,                         # square, reduce-add, 2 full-tile muls
        transcendentals=2 * n,                   # sqrt + reciprocal per row
        bytes_accessed=n * d * (x_it + out_it) + d * w_it,
    )

    kernel = functools.partial(_rms_norm_kernel, eps=float(eps), d_true=d)
    out = pl.pallas_call(
        kernel,
        out_shape=jax.ShapeDtypeStruct((n, d_pad), out_dtype),
        grid=grid,
        in_specs=[
            pl.BlockSpec((tb, d_pad), lambda i: (i, 0)),   # x rows for this step
            pl.BlockSpec((1, d_pad), lambda i: (0, 0)),    # shared weight vector
        ],
        out_specs=pl.BlockSpec((tb, d_pad), lambda i: (i, 0)),
        compiler_params=pltpu.CompilerParams(
            dimension_semantics=("parallel",),
            vmem_limit_bytes=vmem_limit,
        ),
        cost_estimate=cost,
    )(x2, w2)

    if d_pad != d:
        out = out[:, :d]
    return out.reshape(orig_shape)


def init_rms_norm_weight(d: int) -> jax.Array:
    # Matches nn.Parameter(torch.ones(d)).
    return jnp.ones((d,), dtype=jnp.float32)


if __name__ == "__main__":
    key = jax.random.PRNGKey(0)
    kx, kw, kx2, kx3 = jax.random.split(key, 4)

    def ref_rms_norm(x, weight, eps=1e-5):
        # Pure-JAX reference with identical semantics to the PyTorch module (f32).
        xf = x.astype(jnp.float32)
        rms = jnp.linalg.norm(xf, axis=-1, keepdims=True) * x.shape[-1] ** (-0.5)
        return weight.astype(jnp.float32) * (xf / (rms + eps))

    # 1) f32, D multiple of 128, enough rows for a multi-step ("parallel") grid.
    batch, seq, d = 4, 8, 128
    x = jax.random.normal(kx, (batch, seq, d), dtype=jnp.float32)
    weight = init_rms_norm_weight(d) + 0.1 * jax.random.normal(kw, (d,), jnp.float32)
    out = jax.block_until_ready(rms_norm(x, weight))
    assert out.shape == x.shape, out.shape
    assert out.dtype == jnp.float32, out.dtype
    assert bool(jnp.allclose(out, ref_rms_norm(x, weight), atol=5e-3, rtol=5e-3)), \
        "mismatch (f32, multi-step grid)"

    # 2) f32, D NOT a multiple of 128 -> exercises the lane-padding path.
    d2 = 96
    x2 = jax.random.normal(kx2, (2, 8, d2), dtype=jnp.float32)
    w2 = init_rms_norm_weight(d2)
    out2 = jax.block_until_ready(rms_norm(x2, w2))
    assert out2.shape == x2.shape, out2.shape
    assert bool(jnp.allclose(out2, ref_rms_norm(x2, w2), atol=5e-3, rtol=5e-3)), \
        "mismatch (padded D)"

    # 3) bf16 activations with f32 weight -> promoted f32 output, 16-row packing.
    x3 = jax.random.normal(kx3, (2, 8, d), dtype=jnp.float32).astype(jnp.bfloat16)
    out3 = jax.block_until_ready(rms_norm(x3, weight))
    assert out3.shape == x3.shape, out3.shape
    assert out3.dtype == jnp.float32, out3.dtype
    assert bool(jnp.allclose(out3, ref_rms_norm(x3, weight), atol=2e-2, rtol=2e-2)), \
        "mismatch (bf16 input)"

    print("KERNEL_OK")
</pallas_src>

<mosaic_0001>
module attributes {stable_mosaic.version = 11 : i64} {
  func.func @_rms_norm_kernel(%arg0: i32, %arg1: memref<16x128xf32, #tpu.memory_space<vmem>>, %arg2: memref<1x128xf32, #tpu.memory_space<vmem>>, %arg3: memref<16x128xf32, #tpu.memory_space<vmem>>) attributes {dimension_semantics = [#tpu.dimension_semantics<parallel>], iteration_bounds = array<i64: 2>, scalar_prefetch = 0 : i64, scratch_operands = 0 : i64, tpu.core_type = #tpu.core_type<tc>, window_params = [{transform_indices = @transform_0, window_bounds = array<i64: 16, 128>}, {pipeline_mode = #tpu.pipeline_mode<synchronous>, transform_indices = @transform_1, window_bounds = array<i64: 1, 128>}, {transform_indices = @transform_2, window_bounds = array<i64: 16, 128>}]} {
    %c0 = arith.constant 0 : index
    %c0_0 = arith.constant 0 : index
    %0 = vector.load %arg1[%c0, %c0_0] : memref<16x128xf32, #tpu.memory_space<vmem>>, vector<16x128xf32>
    %1 = arith.mulf %0, %0 : vector<16x128xf32>
    %cst = arith.constant dense<0.000000e+00> : vector<16xf32>
    %2 = vector.multi_reduction <add>, %1, %cst [1] : vector<16x128xf32> to vector<16xf32>
    %3 = vector.shape_cast %2 : vector<16xf32> to vector<16x1xf32>
    %cst_1 = arith.constant 7.812500e-03 : f32
    %4 = vector.broadcast %cst_1 : f32 to vector<16x1xf32>
    %5 = arith.mulf %3, %4 : vector<16x1xf32>
    %6 = math.sqrt %5 : vector<16x1xf32>
    %cst_2 = arith.constant 9.99999974E-6 : f32
    %7 = vector.broadcast %cst_2 : f32 to vector<16x1xf32>
    %8 = arith.addf %6, %7 : vector<16x1xf32>
    %9 = tpu.reciprocal %8 {approx = true} : vector<16x1xf32> -> vector<16x1xf32>
    %c0_3 = arith.constant 0 : index
    %c0_4 = arith.constant 0 : index
    %10 = vector.load %arg2[%c0_3, %c0_4] : memref<1x128xf32, #tpu.memory_space<vmem>>, vector<1x128xf32>
    %c0_5 = arith.constant 0 : index
    %c0_6 = arith.constant 0 : index
    %11 = vector.load %arg1[%c0_5, %c0_6] : memref<16x128xf32, #tpu.memory_space<vmem>>, vector<16x128xf32>
    %12 = vector.broadcast %9 : vector<16x1xf32> to vector<16x128xf32>
    %13 = arith.mulf %11, %12 : vector<16x128xf32>
    %14 = vector.broadcast %10 : vector<1x128xf32> to vector<16x128xf32>
    %15 = arith.mulf %13, %14 : vector<16x128xf32>
    %c0_7 = arith.constant 0 : index
    %c0_8 = arith.constant 0 : index
    %16 = vector.load %arg3[%c0_7, %c0_8] : memref<16x128xf32, #tpu.memory_space<vmem>>, vector<16x128xf32>
    tpu.vector_store %arg3[%c0_7, %c0_8], %15 {strides = array<i32>} : memref<16x128xf32, #tpu.memory_space<vmem>>, vector<16x128xf32>,
    return
  }
  func.func @transform_0(%arg0: i32) -> (i32, i32) {
    %c0_i32 = arith.constant 0 : i32
    %c0_i32_0 = arith.constant 0 : i32
    return %arg0, %c0_i32 : i32, i32
  }
  func.func @transform_1(%arg0: i32) -> (i32, i32) {
    %c0_i32 = arith.constant 0 : i32
    %c0_i32_0 = arith.constant 0 : i32
    %c0_i32_1 = arith.constant 0 : i32
    return %c0_i32, %c0_i32_0 : i32, i32
  }
  func.func @transform_2(%arg0: i32) -> (i32, i32) {
    %c0_i32 = arith.constant 0 : i32
    %c0_i32_0 = arith.constant 0 : i32
    return %arg0, %c0_i32 : i32, i32
  }
}

</mosaic_0001>

<llo_original>
// kernel: tpu_custom_call.1
$region0: #{tpu_custom_call.1}
  #allocation0 [shape = 'u32[]', space=smem, size = 0x4, offset = 0x4, fixed_abs, tag = 'smem constant byte address 0x4 - core index']
  #allocation1 [shape = 'u32[72,128]{1,0:T(1,128)}', space=vmem, size = 0x9000, scoped, tag = 'internal scratch']
  %s0 = inlined_call_operand.hbm [shape: f32[32,128], index: 0, kind: input, shape index: {}]
  %s1 = inlined_call_operand.hbm [shape: f32[1,128], index: 1, kind: input, shape index: {}]
  %s2 = inlined_call_operand.hbm [shape: f32[32,128], index: 2, kind: output, shape index: {}]
  %s3 = sld [smem:[#allocation0]]
  $region49: #{tpu_custom_call.1} parent=0
    _
  %s5 = ssub.s32 1, %s3
  %s6 = scalar_select 0, %s5, %s3
  $region1: #{tpu_custom_call.1} parent=0
    #allocation2 [shape = 'u8[16384]{0}', space=vmem, size = 0x4000, scoped, tag = 'input window, operand 0']
    #allocation3 [shape = 's32[2]{0}', space=sflag, size = 0x8, scoped, tag = 'scoped memory for tpu_custom_call.1']
    #allocation4 [shape = 's32[2]{0}', space=sflag, size = 0x8, scoped, tag = 'scoped memory for tpu_custom_call.1']
    #allocation5 [shape = 'u8[512]{0}', space=vmem, size = 0x400, scoped, tag = 'input window, operand 1, single buffered']
    #allocation6 [shape = 's32[1]{0}', space=sflag, size = 0x4, scoped, tag = 'scoped memory for tpu_custom_call.1']
    #allocation7 [shape = 'u8[16384]{0}', space=vmem, size = 0x4000, scoped, tag = 'output window, operand 0']
    %7 = vsyncpa [#allocation3], 0
    %s8 = scalar_lea.sflag [#allocation3], 1
    %9 = vsyncpa %s8, 0
    %10 = vsyncpa [#allocation6], 0
    %11 = vsyncpa [#allocation4], 0
    %s12 = scalar_lea.sflag [#allocation4], 1
    %13 = vsyncpa %s12, 0
    loop: start=0, step=1, limit=4
    $region2: #{tpu_custom_call.1} parent=1 // loop_pre_header
      _
    $region3: #{tpu_custom_call.1} parent=1 // loop_header
      %s15 = sphi 0, %s19
      %p16 = scmp.ge.s32.totalorder %s15, 4
      %s25 = sphi 0, %s27
      %s28 = sphi 0, %s25
      %s29 = sphi 0, %s28
      %s45 = sphi 0, %s29
      %s49 = sphi 0, %s49
      %s51 = sphi 0, %s49
      %s52 = sphi 0, %s51
      %s66 = sphi 0, %s52
      %s72 = sphi 0, %s74
      %s75 = sphi 0, %s72
      %s76 = sphi 0, %s75
      %s92 = sphi 0, %s76
    $region4: #{tpu_custom_call.1} parent=1 // loop_header_branch
      %18 = sbr.rel (%p16) target = $region8
    $region5: #{tpu_custom_call.1} parent=1 // loop_body
      %s20 = ssub.s32 %s15, 1
      %s21 = ssub.s32 %s15, 2
      %s22 = sadd.s32 %s15, 1
      %s23 = ssub.s32 %s15, %s22
      %p24 = scmp.eq.s32.totalorder %s23, 0
      %s26 = sadd.s32 %s25, 1
      %s27 = scalar_select %p24, %s25, %s26
      %p30 = pneg %p24
      %p31 = scmp.eq.s32.totalorder %s15, 1
      %p32 = por %p30, %p31
      %p33 = scmp.ne.s32.totalorder %s25, %s28
      %p34 = scmp.eq.s32.totalorder %s15, 0
      %p35 = por %p33, %p34
      %p36 = scmp.ne.s32.totalorder %s25, %s28
      %p37 = scmp.eq.s32.totalorder %s20, 1
      %p38 = por %p36, %p37
      %p39 = scmp.ne.s32.totalorder %s28, %s29
      %p40 = scmp.eq.s32.totalorder %s20, 0
      %p41 = por %p39, %p40
      %p42 = scmp.ne.s32.totalorder %s28, %s29
      %p43 = scmp.eq.s32.totalorder %s21, 1
      %p44 = por %p42, %p43
      %p46 = scmp.ne.s32.totalorder %s29, %s45
      %p47 = scmp.eq.s32.totalorder %s21, 0
      %p48 = por %p46, %p47
      %s50 = sadd.s32 %s49, 1
      %p53 = scmp.eq.s32.totalorder %s15, 1
      %p54 = scmp.ne.s32.totalorder %s49, %s51
      %p55 = scmp.eq.s32.totalorder %s15, 0
      %p56 = por %p54, %p55
      %p57 = scmp.ne.s32.totalorder %s49, %s51
      %p58 = scmp.eq.s32.totalorder %s20, 1
      %p59 = por %p57, %p58
      %p60 = scmp.ne.s32.totalorder %s51, %s52
      %p61 = scmp.eq.s32.totalorder %s20, 0
      %p62 = por %p60, %p61
      %p63 = scmp.ne.s32.totalorder %s51, %s52
      %p64 = scmp.eq.s32.totalorder %s21, 1
      %p65 = por %p63, %p64
      %p67 = scmp.ne.s32.totalorder %s52, %s66
      %p68 = scmp.eq.s32.totalorder %s21, 0
      %p69 = por %p67, %p68
      %s70 = ssub.s32 %s15, %s22
      %p71 = scmp.eq.s32.totalorder %s70, 0
      %s73 = sadd.s32 %s72, 1
      %s74 = scalar_select %p71, %s72, %s73
      %p77 = pneg %p71
      %p78 = scmp.eq.s32.totalorder %s15, 1
      %p79 = por %p77, %p78
      %p80 = scmp.ne.s32.totalorder %s72, %s75
      %p81 = scmp.eq.s32.totalorder %s15, 0
      %p82 = por %p80, %p81
      %p83 = scmp.ne.s32.totalorder %s72, %s75
      %p84 = scmp.eq.s32.totalorder %s20, 1
      %p85 = por %p83, %p84
      %p86 = scmp.ne.s32.totalorder %s75, %s76
      %p87 = scmp.eq.s32.totalorder %s20, 0
      %p88 = por %p86, %p87
      %p89 = scmp.ne.s32.totalorder %s75, %s76
      %p90 = scmp.eq.s32.totalorder %s21, 1
      %p91 = por %p89, %p90
      %p93 = scmp.ne.s32.totalorder %s76, %s92
      %p94 = scmp.eq.s32.totalorder %s21, 0
      %p95 = por %p93, %p94
      %p96 = scmp.le.s32.totalorder 1, %s15
      %p97 = scmp.lt.s32.totalorder %s15, 3
      %p98 = pnand %p96, %p97
      %p99 = pneg %p98
      // Predicated region
      $region9: #{tpu_custom_call.1} parent=5 // pred_check
        _
      $region10: #{tpu_custom_call.1} parent=5 // pred_check_branch
        %101 = sbr.rel (%p98) target = $region12
      $region11: #{tpu_custom_call.1} parent=5 // pred_region
        %s102 = ssub.s32 %s15, 1
        // Predicated region
        $region13: #{tpu_custom_call.1} parent=11 // pred_check
          %p103 = pneg %p62
        $region14: #{tpu_custom_call.1} parent=11 // pred_check_branch
          %105 = sbr.rel (%p103) target = $region16
        $region15: #{tpu_custom_call.1} parent=11 // pred_region
          %107 = vsyncadd [#allocation6], 0
          %s109 = sshll.u32 %s1, 4
          %s110 = int_to_ptr.hbm [resolvable:$true] %s109
          %s111 = sshll.u32 [#allocation5], 4
          %s112 = int_to_ptr.vmem [resolvable:$true] %s111
          %114 = dma.hbm_to_vmem [thread:$0]  %s110, 16, %s112, [#allocation6]
        $region16: #{tpu_custom_call.1} parent=11 // pred_fallthru
          _
      $region12: #{tpu_custom_call.1} parent=5 // pred_fallthru
        _
      %p115 = scmp.lt.s32.totalorder %s15, 2
      // Predicated region
      $region17: #{tpu_custom_call.1} parent=5 // pred_check
        %p116 = pneg %p115
      $region18: #{tpu_custom_call.1} parent=5 // pred_check_branch
        %118 = sbr.rel (%p116) target = $region20
      $region19: #{tpu_custom_call.1} parent=5 // pred_region
        // Predicated region
        $region21: #{tpu_custom_call.1} parent=19 // pred_check
          %p119 = pneg %p35
        $region22: #{tpu_custom_call.1} parent=19 // pred_check_branch
          %121 = sbr.rel (%p119) target = $region24
        $region23: #{tpu_custom_call.1} parent=19 // pred_region
          %s122 = sand.u32 %s25, 1
          %s123 = scalar_lea.sflag [#allocation3], %s122
          %s124 = sand.u32 %s25, 1
          %s125 = smul.addr %s124, 16
          %s126 = scalar_lea.vmem [#allocation2], %s125
          %s127 = smul.u32 2, %s15
          %129 = vsyncadd %s123, 0
          %s130 = smul.addr %s127, 8
          %s131 = scalar_lea.hbm %s0, %s130
          %s132 = sshll.u32 %s131, 4
          %s133 = int_to_ptr.hbm [resolvable:$true] %s132
          %s134 = sshll.u32 %s126, 4
          %s135 = int_to_ptr.vmem [resolvable:$true] %s134
          %140 = dma.hbm_to_vmem [thread:$0]  %s133, 256, %s135, %s123, 128, 128, 8
        $region24: #{tpu_custom_call.1} parent=19 // pred_fallthru
          _
      $region20: #{tpu_custom_call.1} parent=5 // pred_fallthru
        _
      %p141 = scmp.le.s32.totalorder 1, %s15
      %p142 = scmp.lt.s32.totalorder %s15, 3
      %p143 = pnand %p141, %p142
      %p144 = pneg %p143
      // Predicated region
      $region25: #{tpu_custom_call.1} parent=5 // pred_check
        _
      $region26: #{tpu_custom_call.1} parent=5 // pred_check_branch
        %146 = sbr.rel (%p143) target = $region28
      $region27: #{tpu_custom_call.1} parent=5 // pred_region
        %s147 = ssub.s32 %s15, 1
        %s148 = sand.u32 %s28, 1
        %s149 = scalar_lea.sflag [#allocation3], %s148
        %s150 = sand.u32 %s28, 1
        %s151 = smul.addr %s150, 16
        %s152 = scalar_lea.vmem [#allocation2], %s151
        // Predicated region
        $region29: #{tpu_custom_call.1} parent=27 // pred_check
          %p153 = pneg %p41
        $region30: #{tpu_custom_call.1} parent=27 // pred_check_branch
          %155 = sbr.rel (%p153) target = $region32
        $region31: #{tpu_custom_call.1} parent=27 // pred_region
          %157 = dma.done %s149, 256
        $region32: #{tpu_custom_call.1} parent=27 // pred_fallthru
          _
        // Predicated region
        $region33: #{tpu_custom_call.1} parent=27 // pred_check
          %p158 = pneg %p62
        $region34: #{tpu_custom_call.1} parent=27 // pred_check_branch
          %160 = sbr.rel (%p158) target = $region36
        $region35: #{tpu_custom_call.1} parent=27 // pred_region
          %162 = dma.done [#allocation6], 16
        $region36: #{tpu_custom_call.1} parent=27 // pred_fallthru
          _
        %s163 = sand.u32 %s28, 1
        %s164 = scalar_lea.sflag [#allocation3], %s163
        %s165 = sand.u32 %s28, 1
        %s166 = smul.addr %s165, 16
        %s167 = scalar_lea.vmem [#allocation2], %s166
        %p168 = pneg %p41
        %p169 = pneg %p38
        %p170 = pneg %p62
        %p171 = pneg %p59
        %p172 = pneg %p88
        %p173 = pneg %p85
        %s174 = sand.u32 %s75, 1
        %s175 = scalar_lea.sflag [#allocation4], %s174
        %s176 = sand.u32 %s75, 1
        %s177 = smul.addr %s176, 16
        %s178 = scalar_lea.vmem [#allocation7], %s177
        %s179 = smul.u32 2, %s20
        %s180 = smul.u32 2, %s20
        %v181 = vld [vmem:[%s152] sm:$0xff]
        %v182 = vld [vmem:[%s152 + $0x8] sm:$0xff]
        %v183 = vmul.f32 %v181, %v181
        %v184 = vmul.f32 %v182, %v182
        %185 = vadd.xlane.f32.xlu0 %v183
        %v186 = vpop.xlane.xlu0 %185
        %187 = vadd.xlane.f32.xlu0 %v184
        %v188 = vpop.xlane.xlu0 %187
        %v189 = vmul.f32 %v186, 0.0078125
        %v190 = vmul.f32 %v188, 0.0078125
        %v191 = vrsqrt.pop %v189
        %v192 = vmul.f32 %v191, %v189
        %v193 = vmul.f32 %v192, %v191
        %v194 = vmul.f32 0.5, %v193
        %v195 = vsub.f32 1.5, %v194
        %v196 = vmul.f32 %v191, %v195
        %v197 = vmul.f32 %v189, %v196
        %vm198 = vcmp.eq.f32.partialorder %v189, inf
        %v199 = vsel %vm198, %v189, %v197
        %vm200 = vcmp.eq.f32.partialorder %v189, 0.0
        %v201 = vand.u32 %v189, 2147483648
        %v202 = vsel %vm200, %v201, %v199
        %v203 = vrsqrt.pop %v190
        %v204 = vmul.f32 %v203, %v190
        %v205 = vmul.f32 %v204, %v203
        %v206 = vmul.f32 0.5, %v205
        %v207 = vsub.f32 1.5, %v206
        %v208 = vmul.f32 %v203, %v207
        %v209 = vmul.f32 %v190, %v208
        %vm210 = vcmp.eq.f32.partialorder %v190, inf
        %v211 = vsel %vm210, %v190, %v209
        %vm212 = vcmp.eq.f32.partialorder %v190, 0.0
        %v213 = vand.u32 %v190, 2147483648
        %v214 = vsel %vm212, %v213, %v211
        %v215 = vadd.f32 %v202, 1e-05
        %v216 = vadd.f32 %v214, 1e-05
        %v217 = vrcp.pop %v215
        %v218 = vrcp.pop %v216
        %v219 = vld [vmem:[#allocation5] sm:$0x1]
        %v220 = vmul.f32 %v181, %v217
        %v221 = vmul.f32 %v182, %v218
        %v223 = vperm.slane %v219, 0
        %v225 = vmul.f32 %v220, %v223
        %v226 = vmul.f32 %v221, %v223
        %227 = vst [vmem:[%s178] sm:$0xff] %v225
        %228 = vst [vmem:[%s178 + $0x8] sm:$0xff] %v226
        %s229 = sand.u32 %s75, 1
        %s230 = scalar_lea.sflag [#allocation4], %s229
        %s231 = sand.u32 %s75, 1
        %s232 = smul.addr %s231, 16
        %s233 = scalar_lea.vmem [#allocation7], %s232
        // Predicated region
        $region37: #{tpu_custom_call.1} parent=27 // pred_check
          %p234 = pneg %p85
        $region38: #{tpu_custom_call.1} parent=27 // pred_check_branch
          %236 = sbr.rel (%p234) target = $region40
        $region39: #{tpu_custom_call.1} parent=27 // pred_region
          %s237 = smul.u32 2, %s20
          %239 = vsyncadd %s230, 0
          %s240 = smul.addr %s237, 8
          %s241 = scalar_lea.hbm %s2, %s240
          %s242 = sshll.u32 %s233, 4
          %s243 = int_to_ptr.vmem [resolvable:$true] %s242
          %s244 = sshll.u32 %s241, 4
          %s245 = int_to_ptr.hbm [resolvable:$true] %s244
          %250 = dma.vmem_to_hbm [thread:$0]  %s243, 256, %s245, %s230, 128, 128, 8
        $region40: #{tpu_custom_call.1} parent=27 // pred_fallthru
          _
      $region28: #{tpu_custom_call.1} parent=5 // pred_fallthru
        _
      %p251 = scmp.le.s32.totalorder 2, %s15
      // Predicated region
      $region41: #{tpu_custom_call.1} parent=5 // pred_check
        %p252 = pneg %p251
      $region42: #{tpu_custom_call.1} parent=5 // pred_check_branch
        %254 = sbr.rel (%p252) target = $region44
      $region43: #{tpu_custom_call.1} parent=5 // pred_region
        %s255 = ssub.s32 %s15, 2
        // Predicated region
        $region45: #{tpu_custom_call.1} parent=43 // pred_check
          %p256 = pneg %p91
        $region46: #{tpu_custom_call.1} parent=43 // pred_check_branch
          %258 = sbr.rel (%p256) target = $region48
        $region47: #{tpu_custom_call.1} parent=43 // pred_region
          %s259 = sand.u32 %s76, 1
          %s260 = scalar_lea.sflag [#allocation4], %s259
          %s261 = sand.u32 %s76, 1
          %s262 = smul.addr %s261, 16
          %s263 = scalar_lea.vmem [#allocation7], %s262
          %265 = dma.done %s260, 256
        $region48: #{tpu_custom_call.1} parent=43 // pred_fallthru
          _
      $region44: #{tpu_custom_call.1} parent=5 // pred_fallthru
        _
    $region6: #{tpu_custom_call.1} parent=1 // loop_footer
      %s19 = sadd.s32 1, %s15
    $region7: #{tpu_custom_call.1} parent=1 // loop_footer_branch
      %14 = sbr.rel target = $region3
    $region8: #{tpu_custom_call.1} parent=1 // loop_exit
      _
    %266 = vsyncpa [#allocation3], 1
    %s267 = scalar_lea.sflag [#allocation3], 1
    %268 = vsyncpa %s267, 1
    %269 = vsyncpa [#allocation6], 1
    %270 = vsyncpa [#allocation4], 1
    %s271 = scalar_lea.sflag [#allocation4], 1
    %272 = vsyncpa %s271, 1

</llo_original>
